<compile_context>
chip_gen: v5e
topology: v5e:2x2
jax: 0.10.0
libtpu: 0.0.40
codegen_flags: <defaults>
</compile_context>

<pallas_src>
import math
from functools import partial

import jax
import jax.numpy as jnp
from jax.experimental import pallas as pl
from jax.experimental.pallas import tpu as pltpu

# ----- EmergentConfig constants (defaults from the dataclass) -----
NOVELTY_THRESHOLD = 0.7
CURIOSITY_WEIGHT = 0.3
SELF_PLAY_BUFFER_SIZE = 1000
MIN_NOVELTY_COUNT = 50          # ring-buffer depth used for novelty
EXPLORATION_DECAY = 0.995
MAX_COMPLEXITY = 5.0
COSINE_EPS = 1e-8               # torch F.cosine_similarity default eps

LANE = 128
SUM_REFRESH_PERIOD = 512        # periodic exact recompute of the running column-sum (drift guard)


def _round_up(x, m):
    return (x + m - 1) // m * m


def _vmem_limit_bytes():
    # Generation-aware VMEM budget: half of physical, capped at 64 MiB so the same value
    # is safe on v7x (64 MiB physical VMEM) as well as v5e/v6e (128 MiB).
    try:
        cap = int(pltpu.get_tpu_info().vmem_capacity_bytes)
    except Exception:
        cap = 128 * 1024 * 1024
    return max(16 * 1024 * 1024, min(cap // 2, 64 * 1024 * 1024))


_VMEM_LIMIT = _vmem_limit_bytes()


def _gelu_exact(x):
    # matches torch.nn.GELU() default (erf formulation)
    return 0.5 * x * (1.0 + jax.lax.erf(x * (1.0 / math.sqrt(2.0))))


# ------------------------------- fused kernel -------------------------------

def _fused_kernel(count_ref, pos_ref,                 # SMEM (1,) int32 each
                  state_ref, hist_ref,                # VMEM (B, H) f32
                  shat_ref, sum_ref,                  # VMEM (1, Npad) f32
                  buf_hbm_ref,                        # ANY  (K, Npad) f32 (aliased w/ buf_out)
                  w1a_ref, w1b_ref, b1_ref,           # VMEM f32 weights / biases
                  w2_ref, b2_ref, w3_ref, b3_ref,
                  task_ref,                           # VMEM (B, H)  f32 out
                  metrics_ref,                        # VMEM (1,128) f32 out: [0]=novelty [1]=complexity
                  new_sum_ref,                        # VMEM (1, Npad) f32 out
                  buf_out_ref,                        # ANY  (K, Npad) f32 out (same HBM buffer as input 6)
                  evict_ref, dma_sem):                # scratch: VMEM (1, Npad), DMA semaphore
    cnt = count_ref[0]
    pos = pos_ref[0]

    # Fetch the ring-buffer row this step overwrites (all-zero until the buffer wraps) so
    # the running column-sum can be updated in O(Npad).  Overlaps the MLP below.
    rd = pltpu.make_async_copy(buf_hbm_ref.at[pl.ds(pos, 1), :], evict_ref, dma_sem)
    rd.start()

    x = state_ref[...]

    # ---- task_generator: Linear(2H,H) -> GELU -> Linear(H,H) -> GELU -> Linear(H,H) ----
    # concat([state, history]) folded into two matmuls on the split W1 (no concat op).
    # TODO(synk): at large hidden_dim on v6e/v7x, use bf16 weights/activations (f32 MXU accum)
    # and tile the HxH matmuls over a 'parallel' output-dim grid; keep f32 on v5e (no bf16 VPU/EUP).
    h = (jnp.dot(x, w1a_ref[...], preferred_element_type=jnp.float32)
         + jnp.dot(hist_ref[...], w1b_ref[...], preferred_element_type=jnp.float32)
         + b1_ref[...])
    h = _gelu_exact(h)
    h = jnp.dot(h, w2_ref[...], preferred_element_type=jnp.float32) + b2_ref[...]
    h = _gelu_exact(h)
    task_ref[...] = (jnp.dot(h, w3_ref[...], preferred_element_type=jnp.float32)
                     + b3_ref[...])

    # ---- novelty = 1 - mean cosine similarity vs the last-K normalized states ----
    # sum_j (sum_i buf[i,j]) * shat[j] == sum_i <buf[i], shat>, so one VPU multiply + lane
    # reduce against the running column-sum replaces the (K,Npad)x(Npad,1) contraction.
    shat = shat_ref[...]
    mean_cos = jnp.sum(sum_ref[...] * shat) / jnp.maximum(cnt, 1).astype(jnp.float32)
    novelty = jnp.where(cnt > 0, 1.0 - mean_cos, 1.0)          # empty buffer -> exactly 1.0

    # ---- complexity = min(entropy(softmax(x,-1)) * ||torch.gradient(x)[0]||_F, 5.0) ----
    m = jnp.max(x, axis=-1, keepdims=True)
    e = jnp.exp(x - m)
    s = jnp.sum(e, axis=-1, keepdims=True)
    p = e / s
    logp = (x - m) - jnp.log(s)
    entropy = -jnp.sum(p * logp)

    # dim-0 finite-difference operator built in-kernel from iota (no extra operand DMA).
    b = x.shape[0]
    r = jax.lax.broadcasted_iota(jnp.int32, (b, b), 0)
    c = jax.lax.broadcasted_iota(jnp.int32, (b, b), 1)
    interior = (r > 0) & (r < b - 1)
    dmat = jnp.where(interior & (c == r + 1), 0.5, 0.0)
    dmat = dmat + jnp.where(interior & (c == r - 1), -0.5, 0.0)
    dmat = dmat + jnp.where((r == 0) & (c == 1), 1.0, 0.0)       # one-sided at row 0
    dmat = dmat + jnp.where((r == 0) & (c == 0), -1.0, 0.0)
    dmat = dmat + jnp.where((r == b - 1) & (c == b - 1), 1.0, 0.0)  # one-sided at row B-1
    dmat = dmat + jnp.where((r == b - 1) & (c == b - 2), -1.0, 0.0)
    g = jnp.dot(dmat, x, preferred_element_type=jnp.float32)
    gnorm = jnp.sqrt(jnp.sum(g * g))
    complexity = jnp.minimum(entropy * gnorm, MAX_COMPLEXITY)

    # ---- pack the two scalars into one lane-dense (1,128) store ----
    lane = jax.lax.broadcasted_iota(jnp.int32, (1, LANE), 1)
    out = jnp.where(lane == 0, novelty, 0.0)
    out = jnp.where(lane == 1, complexity, out)
    metrics_ref[...] = out

    # ---- ring-buffer append (torch detect-THEN-append ordering preserved) ----
    rd.wait()
    new_sum_ref[...] = sum_ref[...] - evict_ref[...] + shat
    wr = pltpu.make_async_copy(shat_ref, buf_out_ref.at[pl.ds(pos, 1), :], dma_sem)
    wr.start()
    wr.wait()


# -------------------- fused step (single jit => single host dispatch) --------------------

@partial(jax.jit, donate_argnums=(2,))      # donate the ring buffer so the aliased in-place
def _emergent_step(state, hist, buf, buf_sum, count, pos, params):   # update is truly zero-copy
    batch, hdim = state.shape
    k, npad = buf.shape
    assert batch >= 2, "torch.gradient along dim 0 needs at least 2 rows"
    assert batch * hdim <= npad

    # history mean (torch: stack(last-5).mean(0)); `hist` is a tuple of <=5 arrays whose
    # length is static per trace (at most 6 traces total), so no eager per-step dispatch.
    if len(hist) == 0:
        hist_mean = jnp.zeros_like(state)
    else:
        hist_mean = jnp.mean(jnp.stack(hist, axis=0), axis=0).astype(jnp.float32)

    # lane-padded, L2-normalized flattened state (per-vector norm clamp == torch eps semantics)
    flat = state.reshape(1, batch * hdim).astype(jnp.float32)
    padded = jnp.zeros((1, npad), jnp.float32).at[:, :batch * hdim].set(flat)
    norm = jnp.sqrt(jnp.sum(padded * padded))
    shat = padded / jnp.maximum(norm, COSINE_EPS)

    vmem = pl.BlockSpec(memory_space=pltpu.MemorySpace.VMEM)
    smem = pl.BlockSpec(memory_space=pltpu.MemorySpace.SMEM)
    hbm = pl.BlockSpec(memory_space=pl.ANY)

    task, metrics, new_sum, new_buf = pl.pallas_call(
        _fused_kernel,
        out_shape=(jax.ShapeDtypeStruct((batch, hdim), jnp.float32),
                   jax.ShapeDtypeStruct((1, LANE), jnp.float32),
                   jax.ShapeDtypeStruct((1, npad), jnp.float32),
                   jax.ShapeDtypeStruct((k, npad), jnp.float32)),
        in_specs=[smem, smem, vmem, vmem, vmem, vmem, hbm] + [vmem] * 7,
        out_specs=(vmem, vmem, vmem, hbm),
        scratch_shapes=[pltpu.VMEM((1, npad), jnp.float32),
                        pltpu.SemaphoreType.DMA(())],
        input_output_aliases={6: 3},        # ring buffer is updated in place (one row written)
        compiler_params=pltpu.CompilerParams(vmem_limit_bytes=_VMEM_LIMIT),
    )(count, pos, state, hist_mean, shat, buf_sum, buf, *params)

    new_count = jnp.minimum(count + 1, k)
    new_pos = jnp.where(pos + 1 >= k, 0, pos + 1)
    return task, metrics[0, 0], metrics[0, 1], new_buf, new_sum, new_count, new_pos


@jax.jit
def _refresh_sum(buf):
    # exact recompute of the running column-sum (called every SUM_REFRESH_PERIOD steps)
    return jnp.sum(buf, axis=0, keepdims=True)


# -------------------- module (host-side mutable state + glue) --------------------

def _linear_init(key, fan_in, fan_out):
    # mimic torch.nn.Linear default init: U(-1/sqrt(fan_in), 1/sqrt(fan_in)); stored (in, out)
    kw, kb = jax.random.split(key)
    bound = 1.0 / math.sqrt(fan_in)
    w = jax.random.uniform(kw, (fan_in, fan_out), jnp.float32, -bound, bound)
    b = jax.random.uniform(kb, (1, fan_out), jnp.float32, -bound, bound)
    return w, b


class EmergentBehaviorPallas:
    # TODO(synk): for long rollouts, add a multi-step driver (grid axis over T steps with the
    # weights VMEM-resident across iterations) to amortize dispatch + weight DMA per step.
    def __init__(self, hidden_dim, key):
        self.hidden_dim = hidden_dim
        k1, k2, k3 = jax.random.split(key, 3)
        w1, b1 = _linear_init(k1, 2 * hidden_dim, hidden_dim)
        w2, b2 = _linear_init(k2, hidden_dim, hidden_dim)
        w3, b3 = _linear_init(k3, hidden_dim, hidden_dim)
        # f32 weights for parity with the PyTorch f32 Linear layers; W1 split so the
        # concat([state, history]) becomes two matmuls.
        self.params = (w1[:hidden_dim], w1[hidden_dim:], b1, w2, b2, w3, b3)
        # NOTE: the PyTorch novelty_detector MLP is never used in forward(); not materialized.
        self.novelty_history = []       # device scalars (no per-step host sync)
        self.complexity_curve = []      # device scalars
        self.current_exploration_rate = 1.0
        self._steps = 0                 # total states appended (host int)
        self._buf = None                # (K, Npad) normalized ring buffer, HBM-resident
        self._buf_sum = None            # (1, Npad) running column sum of valid rows
        self._count = jnp.zeros((1,), jnp.int32)
        self._pos = jnp.zeros((1,), jnp.int32)

    def _ensure_buffer(self, state):
        if self._buf is None:
            n = state.shape[0] * state.shape[1]
            npad = _round_up(n, LANE)
            self._buf = jnp.zeros((MIN_NOVELTY_COUNT, npad), jnp.float32)
            self._buf_sum = jnp.zeros((1, npad), jnp.float32)

    def forward(self, current_state, action_history):
        self._ensure_buffer(current_state)
        hist = tuple(action_history[-5:]) if action_history else ()

        (task, novelty, complexity,
         self._buf, self._buf_sum, self._count, self._pos) = _emergent_step(
            current_state, hist, self._buf, self._buf_sum,
            self._count, self._pos, self.params)

        if self._steps > 0:             # torch appends to novelty_history only when buffer non-empty
            self.novelty_history.append(novelty)
        self._steps += 1                # ring-buffer append happened on-device inside the step
        if self._steps % SUM_REFRESH_PERIOD == 0:
            self._buf_sum = _refresh_sum(self._buf)     # drift guard for the running sum
        self.current_exploration_rate *= EXPLORATION_DECAY
        self.complexity_curve.append(complexity)

        metrics = {
            "novelty_score": novelty,        # device scalars: converted lazily by the caller,
            "complexity_score": complexity,  # so successive forward() calls can pipeline
            "exploration_rate": self.current_exploration_rate,
            "buffer_size": min(self._steps, SELF_PLAY_BUFFER_SIZE),
        }
        return task, metrics


# ------------------------------------ demo ------------------------------------

if __name__ == "__main__":
    B, H = 2, 32
    root = jax.random.PRNGKey(0)
    k_params, k_s1, k_s2, k_a = jax.random.split(root, 4)

    module = EmergentBehaviorPallas(H, k_params)

    state1 = jax.random.normal(k_s1, (B, H), jnp.float32)
    state2 = jax.random.normal(k_s2, (B, H), jnp.float32)
    action_history = [jax.random.normal(k, (B, H), jnp.float32)
                      for k in jax.random.split(k_a, 3)]

    # First call: empty-buffer path (novelty == 1.0, as in the PyTorch module).
    task1, metrics1 = module.forward(state1, action_history)
    # Second call: exercises the running-sum cosine path + in-place ring-buffer append.
    task2, metrics2 = module.forward(state2, action_history)

    jax.block_until_ready((task1, task2))

    assert task1.shape == (B, H) and task2.shape == (B, H)
    # single host sync at the very end (demo only)
    n1 = float(metrics1["novelty_score"])
    n2 = float(metrics2["novelty_score"])
    c2 = float(metrics2["complexity_score"])
    assert abs(n1 - 1.0) < 1e-6                          # empty buffer -> novelty exactly 1.0
    assert -1e-5 <= n2 <= 2.0 + 1e-5                     # 1 - mean(cos), cos in [-1, 1]
    assert -1e-6 <= c2 <= MAX_COMPLEXITY + 1e-6
    assert bool(jnp.all(jnp.isfinite(task2)))
    assert metrics2["buffer_size"] == 2
    print("KERNEL_OK")
</pallas_src>

<mosaic_0001>
module attributes {stable_mosaic.version = 11 : i64} {
  func.func @_fused_kernel(%arg0: memref<1xi32, #tpu.memory_space<smem>>, %arg1: memref<1xi32, #tpu.memory_space<smem>>, %arg2: memref<2x32xf32, #tpu.memory_space<vmem>>, %arg3: memref<2x32xf32, #tpu.memory_space<vmem>>, %arg4: memref<1x128xf32, #tpu.memory_space<vmem>>, %arg5: memref<1x128xf32, #tpu.memory_space<vmem>>, %arg6: memref<50x128xf32, #tpu.memory_space<any>>, %arg7: memref<32x32xf32, #tpu.memory_space<vmem>>, %arg8: memref<32x32xf32, #tpu.memory_space<vmem>>, %arg9: memref<1x32xf32, #tpu.memory_space<vmem>>, %arg10: memref<32x32xf32, #tpu.memory_space<vmem>>, %arg11: memref<1x32xf32, #tpu.memory_space<vmem>>, %arg12: memref<32x32xf32, #tpu.memory_space<vmem>>, %arg13: memref<1x32xf32, #tpu.memory_space<vmem>>, %arg14: memref<2x32xf32, #tpu.memory_space<vmem>>, %arg15: memref<1x128xf32, #tpu.memory_space<vmem>>, %arg16: memref<1x128xf32, #tpu.memory_space<vmem>>, %arg17: memref<50x128xf32, #tpu.memory_space<any>>, %arg18: memref<1x128xf32, #tpu.memory_space<vmem>>, %arg19: memref<!tpu.dma_semaphore, #tpu.memory_space<semaphore_mem>>) attributes {dimension_semantics = [], scalar_prefetch = 0 : i64, scratch_operands = 2 : i64, tpu.core_type = #tpu.core_type<tc>} {
    %c0 = arith.constant 0 : index
    %0 = memref.load %arg0[%c0] : memref<1xi32, #tpu.memory_space<smem>>
    %c0_0 = arith.constant 0 : index
    %1 = memref.load %arg1[%c0_0] : memref<1xi32, #tpu.memory_space<smem>>
    %c0_i32 = arith.constant 0 : i32
    %2 = tpu.memref_slice %arg6[%1, %c0_i32] : memref<50x128xf32, #tpu.memory_space<any>> -> memref<1x128xf32, #tpu.memory_space<any>>
    tpu.enqueue_dma source(%2 : memref<1x128xf32, #tpu.memory_space<any>>) target(%arg18 : memref<1x128xf32, #tpu.memory_space<vmem>>) target_semaphore(%arg19 : memref<!tpu.dma_semaphore, #tpu.memory_space<semaphore_mem>>)
    %c0_1 = arith.constant 0 : index
    %c0_2 = arith.constant 0 : index
    %3 = vector.load %arg2[%c0_1, %c0_2] : memref<2x32xf32, #tpu.memory_space<vmem>>, vector<2x32xf32>
    %c0_3 = arith.constant 0 : index
    %c0_4 = arith.constant 0 : index
    %4 = vector.load %arg7[%c0_3, %c0_4] : memref<32x32xf32, #tpu.memory_space<vmem>>, vector<32x32xf32>
    %cst = arith.constant dense<0.000000e+00> : vector<2x32xf32>
    %5 = tpu.matmul %3, %4, %cst {dimension_numbers = #tpu.dot_dimension_numbers<[1], [0], [0], [1], [0, 0, 1, 1], [], []>} : vector<2x32xf32>, vector<32x32xf32>, vector<2x32xf32> -> vector<2x32xf32>
    %c0_5 = arith.constant 0 : index
    %c0_6 = arith.constant 0 : index
    %6 = vector.load %arg3[%c0_5, %c0_6] : memref<2x32xf32, #tpu.memory_space<vmem>>, vector<2x32xf32>
    %c0_7 = arith.constant 0 : index
    %c0_8 = arith.constant 0 : index
    %7 = vector.load %arg8[%c0_7, %c0_8] : memref<32x32xf32, #tpu.memory_space<vmem>>, vector<32x32xf32>
    %cst_9 = arith.constant dense<0.000000e+00> : vector<2x32xf32>
    %8 = tpu.matmul %6, %7, %cst_9 {dimension_numbers = #tpu.dot_dimension_numbers<[1], [0], [0], [1], [0, 0, 1, 1], [], []>} : vector<2x32xf32>, vector<32x32xf32>, vector<2x32xf32> -> vector<2x32xf32>
    %9 = arith.addf %5, %8 : vector<2x32xf32>
    %c0_10 = arith.constant 0 : index
    %c0_11 = arith.constant 0 : index
    %10 = vector.load %arg9[%c0_10, %c0_11] : memref<1x32xf32, #tpu.memory_space<vmem>>, vector<1x32xf32>
    %11 = vector.broadcast %10 : vector<1x32xf32> to vector<2x32xf32>
    %12 = arith.addf %9, %11 : vector<2x32xf32>
    %cst_12 = arith.constant 5.000000e-01 : f32
    %13 = vector.broadcast %cst_12 : f32 to vector<2x32xf32>
    %14 = arith.mulf %13, %12 : vector<2x32xf32>
    %cst_13 = arith.constant 0.707106769 : f32
    %15 = vector.broadcast %cst_13 : f32 to vector<2x32xf32>
    %16 = arith.mulf %12, %15 : vector<2x32xf32>
    %17 = math.erf %16 : vector<2x32xf32>
    %cst_14 = arith.constant 1.000000e+00 : f32
    %18 = vector.broadcast %cst_14 : f32 to vector<2x32xf32>
    %19 = arith.addf %18, %17 : vector<2x32xf32>
    %20 = arith.mulf %14, %19 : vector<2x32xf32>
    %c0_15 = arith.constant 0 : index
    %c0_16 = arith.constant 0 : index
    %21 = vector.load %arg10[%c0_15, %c0_16] : memref<32x32xf32, #tpu.memory_space<vmem>>, vector<32x32xf32>
    %cst_17 = arith.constant dense<0.000000e+00> : vector<2x32xf32>
    %22 = tpu.matmul %20, %21, %cst_17 {dimension_numbers = #tpu.dot_dimension_numbers<[1], [0], [0], [1], [0, 0, 1, 1], [], []>} : vector<2x32xf32>, vector<32x32xf32>, vector<2x32xf32> -> vector<2x32xf32>
    %c0_18 = arith.constant 0 : index
    %c0_19 = arith.constant 0 : index
    %23 = vector.load %arg11[%c0_18, %c0_19] : memref<1x32xf32, #tpu.memory_space<vmem>>, vector<1x32xf32>
    %24 = vector.broadcast %23 : vector<1x32xf32> to vector<2x32xf32>
    %25 = arith.addf %22, %24 : vector<2x32xf32>
    %cst_20 = arith.constant 5.000000e-01 : f32
    %26 = vector.broadcast %cst_20 : f32 to vector<2x32xf32>
    %27 = arith.mulf %26, %25 : vector<2x32xf32>
    %cst_21 = arith.constant 0.707106769 : f32
    %28 = vector.broadcast %cst_21 : f32 to vector<2x32xf32>
    %29 = arith.mulf %25, %28 : vector<2x32xf32>
    %30 = math.erf %29 : vector<2x32xf32>
    %cst_22 = arith.constant 1.000000e+00 : f32
    %31 = vector.broadcast %cst_22 : f32 to vector<2x32xf32>
    %32 = arith.addf %31, %30 : vector<2x32xf32>
    %33 = arith.mulf %27, %32 : vector<2x32xf32>
    %c0_23 = arith.constant 0 : index
    %c0_24 = arith.constant 0 : index
    %34 = vector.load %arg12[%c0_23, %c0_24] : memref<32x32xf32, #tpu.memory_space<vmem>>, vector<32x32xf32>
    %cst_25 = arith.constant dense<0.000000e+00> : vector<2x32xf32>
    %35 = tpu.matmul %33, %34, %cst_25 {dimension_numbers = #tpu.dot_dimension_numbers<[1], [0], [0], [1], [0, 0, 1, 1], [], []>} : vector<2x32xf32>, vector<32x32xf32>, vector<2x32xf32> -> vector<2x32xf32>
    %c0_26 = arith.constant 0 : index
    %c0_27 = arith.constant 0 : index
    %36 = vector.load %arg13[%c0_26, %c0_27] : memref<1x32xf32, #tpu.memory_space<vmem>>, vector<1x32xf32>
    %37 = vector.broadcast %36 : vector<1x32xf32> to vector<2x32xf32>
    %38 = arith.addf %35, %37 : vector<2x32xf32>
    %c0_28 = arith.constant 0 : index
    %c0_29 = arith.constant 0 : index
    %39 = vector.load %arg14[%c0_28, %c0_29] : memref<2x32xf32, #tpu.memory_space<vmem>>, vector<2x32xf32>
    tpu.vector_store %arg14[%c0_28, %c0_29], %38 {strides = array<i32>} : memref<2x32xf32, #tpu.memory_space<vmem>>, vector<2x32xf32>,
    %c0_30 = arith.constant 0 : index
    %c0_31 = arith.constant 0 : index
    %40 = vector.load %arg4[%c0_30, %c0_31] : memref<1x128xf32, #tpu.memory_space<vmem>>, vector<1x128xf32>
    %c0_32 = arith.constant 0 : index
    %c0_33 = arith.constant 0 : index
    %41 = vector.load %arg5[%c0_32, %c0_33] : memref<1x128xf32, #tpu.memory_space<vmem>>, vector<1x128xf32>
    %42 = arith.mulf %41, %40 : vector<1x128xf32>
    %43 = vector.shape_cast %42 : vector<1x128xf32> to vector<1x1x128xf32>
    %cst_34 = arith.constant dense<0.000000e+00> : vector<1xf32>
    %44 = vector.multi_reduction <add>, %43, %cst_34 [1, 2] : vector<1x1x128xf32> to vector<1xf32>
    %45 = vector.shape_cast %44 : vector<1xf32> to vector<1x1x1xf32>
    %46 = vector.extract %45[0, 0, 0] : f32 from vector<1x1x1xf32>
    %c1_i32 = arith.constant 1 : i32
    %47 = arith.maxsi %0, %c1_i32 : i32
    %48 = arith.sitofp %47 : i32 to f32
    %49 = arith.divf %46, %48 : f32
    %c0_i32_35 = arith.constant 0 : i32
    %50 = arith.cmpi sgt, %0, %c0_i32_35 : i32
    %cst_36 = arith.constant 1.000000e+00 : f32
    %51 = arith.subf %cst_36, %49 : f32
    %cst_37 = arith.constant 1.000000e+00 : f32
    %52 = arith.select %50, %51, %cst_37 : f32
    %cst_38 = arith.constant dense<0xFF800000> : vector<2xf32>
    %53 = vector.multi_reduction <maximumf>, %3, %cst_38 [1] : vector<2x32xf32> to vector<2xf32>
    %54 = vector.shape_cast %53 : vector<2xf32> to vector<2x1xf32>
    %55 = vector.broadcast %54 : vector<2x1xf32> to vector<2x32xf32>
    %56 = arith.subf %3, %55 : vector<2x32xf32>
    %57 = math.exp %56 : vector<2x32xf32>
    %cst_39 = arith.constant dense<0.000000e+00> : vector<2xf32>
    %58 = vector.multi_reduction <add>, %57, %cst_39 [1] : vector<2x32xf32> to vector<2xf32>
    %59 = vector.shape_cast %58 : vector<2xf32> to vector<2x1xf32>
    %60 = vector.broadcast %59 : vector<2x1xf32> to vector<2x32xf32>
    %61 = arith.divf %57, %60 : vector<2x32xf32>
    %62 = vector.broadcast %54 : vector<2x1xf32> to vector<2x32xf32>
    %63 = arith.subf %3, %62 : vector<2x32xf32>
    %64 = math.log %59 : vector<2x1xf32>
    %65 = vector.broadcast %64 : vector<2x1xf32> to vector<2x32xf32>
    %66 = arith.subf %63, %65 : vector<2x32xf32>
    %67 = arith.mulf %61, %66 : vector<2x32xf32>
    %68 = vector.shape_cast %67 : vector<2x32xf32> to vector<1x2x32xf32>
    %cst_40 = arith.constant dense<0.000000e+00> : vector<1xf32>
    %69 = vector.multi_reduction <add>, %68, %cst_40 [1, 2] : vector<1x2x32xf32> to vector<1xf32>
    %70 = vector.shape_cast %69 : vector<1xf32> to vector<1x1x1xf32>
    %71 = vector.extract %70[0, 0, 0] : f32 from vector<1x1x1xf32>
    %cst_41 = arith.constant 0.000000e+00 : f32
    %72 = arith.subf %cst_41, %71 : f32
    %73 = tpu.iota {dimensions = array<i32: 0>} : vector<2x2xi32>
    %74 = tpu.iota {dimensions = array<i32: 1>} : vector<2x2xi32>
    %c0_i32_42 = arith.constant 0 : i32
    %75 = vector.broadcast %c0_i32_42 : i32 to vector<2x2xi32>
    %76 = arith.cmpi sgt, %73, %75 : vector<2x2xi32>
    %c1_i32_43 = arith.constant 1 : i32
    %77 = vector.broadcast %c1_i32_43 : i32 to vector<2x2xi32>
    %78 = arith.cmpi slt, %73, %77 : vector<2x2xi32>
    %79 = arith.andi %76, %78 : vector<2x2xi1>
    %c1_i32_44 = arith.constant 1 : i32
    %80 = vector.broadcast %c1_i32_44 : i32 to vector<2x2xi32>
    %81 = arith.addi %73, %80 : vector<2x2xi32>
    %82 = arith.cmpi eq, %74, %81 : vector<2x2xi32>
    %83 = arith.andi %79, %82 : vector<2x2xi1>
    %cst_45 = arith.constant 5.000000e-01 : f32
    %cst_46 = arith.constant 0.000000e+00 : f32
    %84 = vector.broadcast %cst_45 : f32 to vector<2x2xf32>
    %85 = vector.broadcast %cst_46 : f32 to vector<2x2xf32>
    %86 = arith.select %83, %84, %85 : vector<2x2xi1>, vector<2x2xf32>
    %c1_i32_47 = arith.constant 1 : i32
    %87 = vector.broadcast %c1_i32_47 : i32 to vector<2x2xi32>
    %88 = arith.subi %73, %87 : vector<2x2xi32>
    %89 = arith.cmpi eq, %74, %88 : vector<2x2xi32>
    %90 = arith.andi %79, %89 : vector<2x2xi1>
    %cst_48 = arith.constant -5.000000e-01 : f32
    %cst_49 = arith.constant 0.000000e+00 : f32
    %91 = vector.broadcast %cst_48 : f32 to vector<2x2xf32>
    %92 = vector.broadcast %cst_49 : f32 to vector<2x2xf32>
    %93 = arith.select %90, %91, %92 : vector<2x2xi1>, vector<2x2xf32>
    %94 = arith.addf %86, %93 : vector<2x2xf32>
    %c0_i32_50 = arith.constant 0 : i32
    %95 = vector.broadcast %c0_i32_50 : i32 to vector<2x2xi32>
    %96 = arith.cmpi eq, %73, %95 : vector<2x2xi32>
    %c1_i32_51 = arith.constant 1 : i32
    %97 = vector.broadcast %c1_i32_51 : i32 to vector<2x2xi32>
    %98 = arith.cmpi eq, %74, %97 : vector<2x2xi32>
    %99 = arith.andi %96, %98 : vector<2x2xi1>
    %cst_52 = arith.constant 1.000000e+00 : f32
    %cst_53 = arith.constant 0.000000e+00 : f32
    %100 = vector.broadcast %cst_52 : f32 to vector<2x2xf32>
    %101 = vector.broadcast %cst_53 : f32 to vector<2x2xf32>
    %102 = arith.select %99, %100, %101 : vector<2x2xi1>, vector<2x2xf32>
    %103 = arith.addf %94, %102 : vector<2x2xf32>
    %c0_i32_54 = arith.constant 0 : i32
    %104 = vector.broadcast %c0_i32_54 : i32 to vector<2x2xi32>
    %105 = arith.cmpi eq, %73, %104 : vector<2x2xi32>
    %c0_i32_55 = arith.constant 0 : i32
    %106 = vector.broadcast %c0_i32_55 : i32 to vector<2x2xi32>
    %107 = arith.cmpi eq, %74, %106 : vector<2x2xi32>
    %108 = arith.andi %105, %107 : vector<2x2xi1>
    %cst_56 = arith.constant -1.000000e+00 : f32
    %cst_57 = arith.constant 0.000000e+00 : f32
    %109 = vector.broadcast %cst_56 : f32 to vector<2x2xf32>
    %110 = vector.broadcast %cst_57 : f32 to vector<2x2xf32>
    %111 = arith.select %108, %109, %110 : vector<2x2xi1>, vector<2x2xf32>
    %112 = arith.addf %103, %111 : vector<2x2xf32>
    %c1_i32_58 = arith.constant 1 : i32
    %113 = vector.broadcast %c1_i32_58 : i32 to vector<2x2xi32>
    %114 = arith.cmpi eq, %73, %113 : vector<2x2xi32>
    %c1_i32_59 = arith.constant 1 : i32
    %115 = vector.broadcast %c1_i32_59 : i32 to vector<2x2xi32>
    %116 = arith.cmpi eq, %74, %115 : vector<2x2xi32>
    %117 = arith.andi %114, %116 : vector<2x2xi1>
    %cst_60 = arith.constant 1.000000e+00 : f32
    %cst_61 = arith.constant 0.000000e+00 : f32
    %118 = vector.broadcast %cst_60 : f32 to vector<2x2xf32>
    %119 = vector.broadcast %cst_61 : f32 to vector<2x2xf32>
    %120 = arith.select %117, %118, %119 : vector<2x2xi1>, vector<2x2xf32>
    %121 = arith.addf %112, %120 : vector<2x2xf32>
    %c1_i32_62 = arith.constant 1 : i32
    %122 = vector.broadcast %c1_i32_62 : i32 to vector<2x2xi32>
    %123 = arith.cmpi eq, %73, %122 : vector<2x2xi32>
    %c0_i32_63 = arith.constant 0 : i32
    %124 = vector.broadcast %c0_i32_63 : i32 to vector<2x2xi32>
    %125 = arith.cmpi eq, %74, %124 : vector<2x2xi32>
    %126 = arith.andi %123, %125 : vector<2x2xi1>
    %cst_64 = arith.constant -1.000000e+00 : f32
    %cst_65 = arith.constant 0.000000e+00 : f32
    %127 = vector.broadcast %cst_64 : f32 to vector<2x2xf32>
    %128 = vector.broadcast %cst_65 : f32 to vector<2x2xf32>
    %129 = arith.select %126, %127, %128 : vector<2x2xi1>, vector<2x2xf32>
    %130 = arith.addf %121, %129 : vector<2x2xf32>
    %cst_66 = arith.constant dense<0.000000e+00> : vector<2x32xf32>
    %131 = tpu.matmul %130, %3, %cst_66 {dimension_numbers = #tpu.dot_dimension_numbers<[1], [0], [0], [1], [0, 0, 1, 1], [], []>} : vector<2x2xf32>, vector<2x32xf32>, vector<2x32xf32> -> vector<2x32xf32>
    %132 = arith.mulf %131, %131 : vector<2x32xf32>
    %133 = vector.shape_cast %132 : vector<2x32xf32> to vector<1x2x32xf32>
    %cst_67 = arith.constant dense<0.000000e+00> : vector<1xf32>
    %134 = vector.multi_reduction <add>, %133, %cst_67 [1, 2] : vector<1x2x32xf32> to vector<1xf32>
    %135 = vector.shape_cast %134 : vector<1xf32> to vector<1x1x1xf32>
    %136 = vector.extract %135[0, 0, 0] : f32 from vector<1x1x1xf32>
    %137 = math.sqrt %136 : f32
    %138 = arith.mulf %72, %137 : f32
    %cst_68 = arith.constant 5.000000e+00 : f32
    %139 = arith.minimumf %138, %cst_68 : f32
    %140 = tpu.iota {dimensions = array<i32: 1>} : vector<1x128xi32>
    %c0_i32_69 = arith.constant 0 : i32
    %141 = vector.broadcast %c0_i32_69 : i32 to vector<1x128xi32>
    %142 = arith.cmpi eq, %140, %141 : vector<1x128xi32>
    %cst_70 = arith.constant 0.000000e+00 : f32
    %143 = vector.broadcast %52 : f32 to vector<1x128xf32>
    %144 = vector.broadcast %cst_70 : f32 to vector<1x128xf32>
    %145 = arith.select %142, %143, %144 : vector<1x128xi1>, vector<1x128xf32>
    %c1_i32_71 = arith.constant 1 : i32
    %146 = vector.broadcast %c1_i32_71 : i32 to vector<1x128xi32>
    %147 = arith.cmpi eq, %140, %146 : vector<1x128xi32>
    %148 = vector.broadcast %139 : f32 to vector<1x128xf32>
    %149 = arith.select %147, %148, %145 : vector<1x128xi1>, vector<1x128xf32>
    %c0_72 = arith.constant 0 : index
    %c0_73 = arith.constant 0 : index
    %150 = vector.load %arg15[%c0_72, %c0_73] : memref<1x128xf32, #tpu.memory_space<vmem>>, vector<1x128xf32>
    tpu.vector_store %arg15[%c0_72, %c0_73], %149 {strides = array<i32>} : memref<1x128xf32, #tpu.memory_space<vmem>>, vector<1x128xf32>,
    %c0_i32_74 = arith.constant 0 : i32
    %151 = tpu.memref_slice %arg6[%1, %c0_i32_74] : memref<50x128xf32, #tpu.memory_space<any>> -> memref<1x128xf32, #tpu.memory_space<any>>
    tpu.wait_dma2 semaphore(%arg19 : memref<!tpu.dma_semaphore, #tpu.memory_space<semaphore_mem>>) src(%151 : memref<1x128xf32, #tpu.memory_space<any>>) dst(%arg18 : memref<1x128xf32, #tpu.memory_space<vmem>>)
    %c0_75 = arith.constant 0 : index
    %c0_76 = arith.constant 0 : index
    %152 = vector.load %arg5[%c0_75, %c0_76] : memref<1x128xf32, #tpu.memory_space<vmem>>, vector<1x128xf32>
    %c0_77 = arith.constant 0 : index
    %c0_78 = arith.constant 0 : index
    %153 = vector.load %arg18[%c0_77, %c0_78] : memref<1x128xf32, #tpu.memory_space<vmem>>, vector<1x128xf32>
    %154 = arith.subf %152, %153 : vector<1x128xf32>
    %155 = arith.addf %154, %40 : vector<1x128xf32>
    %c0_79 = arith.constant 0 : index
    %c0_80 = arith.constant 0 : index
    %156 = vector.load %arg16[%c0_79, %c0_80] : memref<1x128xf32, #tpu.memory_space<vmem>>, vector<1x128xf32>
    tpu.vector_store %arg16[%c0_79, %c0_80], %155 {strides = array<i32>} : memref<1x128xf32, #tpu.memory_space<vmem>>, vector<1x128xf32>,
    %c0_i32_81 = arith.constant 0 : i32
    %157 = tpu.memref_slice %arg17[%1, %c0_i32_81] : memref<50x128xf32, #tpu.memory_space<any>> -> memref<1x128xf32, #tpu.memory_space<any>>
    tpu.enqueue_dma source(%arg4 : memref<1x128xf32, #tpu.memory_space<vmem>>) target(%157 : memref<1x128xf32, #tpu.memory_space<any>>) target_semaphore(%arg19 : memref<!tpu.dma_semaphore, #tpu.memory_space<semaphore_mem>>)
    %c0_i32_82 = arith.constant 0 : i32
    %158 = tpu.memref_slice %arg17[%1, %c0_i32_82] : memref<50x128xf32, #tpu.memory_space<any>> -> memref<1x128xf32, #tpu.memory_space<any>>
    tpu.wait_dma2 semaphore(%arg19 : memref<!tpu.dma_semaphore, #tpu.memory_space<semaphore_mem>>) src(%arg4 : memref<1x128xf32, #tpu.memory_space<vmem>>) dst(%158 : memref<1x128xf32, #tpu.memory_space<any>>)
    return
  }
}

</mosaic_0001>

<llo_original>
// kernel: _emergent_step.1
$region0: #{_emergent_step.1}
  #allocation0 [shape = 'u32[]', space=smem, size = 0x4, offset = 0x4, fixed_abs, tag = 'smem constant byte address 0x4 - core index']
  #allocation1 [shape = 'u32[72,128]{1,0:T(1,128)}', space=vmem, size = 0x9000, scoped, tag = 'internal scratch']
  #allocation2 [shape = 'f32[1,128]{1,0:T(1,128)}', space=vmem, size = 0x200, scoped, tag = 'scratch operand']
  #allocation3 [shape = 's32[1]{0}', space=sflag, size = 0x4, scoped, tag = 'scratch operand']
  #allocation4 [shape = 's32[1]{0:T(128)S(6)}', space=smem, size = 0x200, scoped, tag = 'scoped memory for _emergent_step.1']
  #allocation5 [shape = 's32[1]{0:T(128)S(6)}', space=smem, size = 0x200, scoped, tag = 'scoped memory for _emergent_step.1']
  #allocation17 [shape = 's32[]', space=sflag, size = 0x4, offset = 0, fixed_abs, tag = 'sflag constant byte address 0x0 - dummy sync flag']
  #allocation18 [shape = 's32[]', space=sflag, size = 0x4, offset = 0, fixed_abs, tag = 'sflag constant byte address 0x0 - dummy sync flag']
  #allocation19 [shape = 'u32[]', space=smem, size = 0x4, offset = 0x44, fixed_abs, tag = 'smem constant byte address 0x44 - assertion arg 0']
  #allocation20 [shape = 'u32[]', space=smem, size = 0x4, offset = 0x48, fixed_abs, tag = 'smem constant byte address 0x48 - assertion arg 1']
  #allocation21 [shape = 's32[]', space=sflag, size = 0x4, offset = 0, fixed_abs, tag = 'sflag constant byte address 0x0 - dummy sync flag']
  #allocation22 [shape = 's32[]', space=sflag, size = 0x4, offset = 0, fixed_abs, tag = 'sflag constant byte address 0x0 - dummy sync flag']
  %s0 = inlined_call_operand.<no memory space> [shape: s32[1], index: 0, kind: input, shape index: {}]
  %s1 = inlined_call_operand.<no memory space> [shape: s32[1], index: 1, kind: input, shape index: {}]
  %s2 = inlined_call_operand.vmem [shape: f32[2,32], index: 2, kind: input, shape index: {}]
  %s3 = inlined_call_operand.vmem [shape: f32[2,32], index: 3, kind: input, shape index: {}]
  %s4 = inlined_call_operand.vmem [shape: f32[1,128], index: 4, kind: input, shape index: {}]
  %s5 = inlined_call_operand.vmem [shape: f32[1,128], index: 5, kind: input, shape index: {}]
  %s6 = inlined_call_operand.hbm [shape: f32[50,128], index: 6, kind: input, shape index: {}, may-alias: {6,17}]
  %s7 = inlined_call_operand.hbm [shape: f32[32,32], index: 7, kind: input, shape index: {}]
  %s8 = inlined_call_operand.hbm [shape: f32[32,32], index: 8, kind: input, shape index: {}]
  %s9 = inlined_call_operand.vmem [shape: f32[1,32], index: 9, kind: input, shape index: {}]
  %s10 = inlined_call_operand.hbm [shape: f32[32,32], index: 10, kind: input, shape index: {}]
  %s11 = inlined_call_operand.vmem [shape: f32[1,32], index: 11, kind: input, shape index: {}]
  %s12 = inlined_call_operand.hbm [shape: f32[32,32], index: 12, kind: input, shape index: {}]
  %s13 = inlined_call_operand.vmem [shape: f32[1,32], index: 13, kind: input, shape index: {}]
  %s14 = inlined_call_operand.hbm [shape: f32[2,32], index: 14, kind: output, shape index: {0}]
  %s15 = inlined_call_operand.vmem [shape: f32[1,128], index: 15, kind: output, shape index: {1}]
  %s16 = inlined_call_operand.hbm [shape: f32[1,128], index: 16, kind: output, shape index: {2}]
  %s17 = inlined_call_operand.hbm [shape: f32[50,128], index: 17, kind: output, shape index: {3}, may-alias: {6,17}]
  %18 = xla_tuple %s14, %s15, %s16, %s17
  %s19 = sld [smem:[#allocation0]]
  $region102: #{_emergent_step.1} parent=0
    _
  %s21 = ssub.s32 1, %s19
  %s22 = scalar_select 0, %s21, %s19
  %23 = sst [smem:[#allocation4]] %s0
  %24 = sst [smem:[#allocation5]] %s1
  $region1: #{_emergent_step.1} parent=0
    #allocation6 [shape = 'u8[16384]{0}', space=vmem, size = 0x4000, scoped, tag = 'input window, operand 7, single buffered']
    #allocation7 [shape = 's32[1]{0}', space=sflag, size = 0x4, scoped, tag = 'scoped memory for _emergent_step.1']
    #allocation8 [shape = 's32[1]{0}', space=sflag, size = 0x4, scoped, tag = 'scoped memory for _emergent_step.1']
    #allocation9 [shape = 'u8[16384]{0}', space=vmem, size = 0x4000, scoped, tag = 'input window, operand 8, single buffered']
    #allocation10 [shape = 's32[1]{0}', space=sflag, size = 0x4, scoped, tag = 'scoped memory for _emergent_step.1']
    #allocation11 [shape = 'u8[16384]{0}', space=vmem, size = 0x4000, scoped, tag = 'input window, operand 10, single buffered']
    #allocation12 [shape = 'u8[16384]{0}', space=vmem, size = 0x4000, scoped, tag = 'input window, operand 12, single buffered']
    #allocation13 [shape = 's32[1]{0}', space=sflag, size = 0x4, scoped, tag = 'scoped memory for _emergent_step.1']
    #allocation14 [shape = 'u8[1024]{0}', space=vmem, size = 0x400, scoped, tag = 'output window, operand 0, single buffered']
    #allocation15 [shape = 'u8[512]{0}', space=vmem, size = 0x400, scoped, tag = 'output window, operand 2, single buffered']
    #allocation16 [shape = 's32[1]{0}', space=sflag, size = 0x4, scoped, tag = 'scoped memory for _emergent_step.1']
    %25 = vsyncpa [#allocation7], 0
    %26 = vsyncpa [#allocation10], 0
    %27 = vsyncpa [#allocation13], 0
    %28 = vsyncpa [#allocation8], 0
    %29 = vsyncpa [#allocation16], 0
    // Predicated region
    $region2: #{_emergent_step.1} parent=1 // pred_check
      _
    $region3: #{_emergent_step.1} parent=1 // pred_check_branch
      %31 = sbr.rel (0) target = $region5
    $region4: #{_emergent_step.1} parent=1 // pred_region
      _
    $region5: #{_emergent_step.1} parent=1 // pred_fallthru
      _
    // Predicated region
    $region6: #{_emergent_step.1} parent=1 // pred_check
      _
    $region7: #{_emergent_step.1} parent=1 // pred_check_branch
      %33 = sbr.rel (0) target = $region9
    $region8: #{_emergent_step.1} parent=1 // pred_region
      _
    $region9: #{_emergent_step.1} parent=1 // pred_fallthru
      _
    // Predicated region
    $region10: #{_emergent_step.1} parent=1 // pred_check
      _
    $region11: #{_emergent_step.1} parent=1 // pred_check_branch
      %35 = sbr.rel (0) target = $region13
    $region12: #{_emergent_step.1} parent=1 // pred_region
      _
    $region13: #{_emergent_step.1} parent=1 // pred_fallthru
      _
    // Predicated region
    $region14: #{_emergent_step.1} parent=1 // pred_check
      _
    $region15: #{_emergent_step.1} parent=1 // pred_check_branch
      %37 = sbr.rel (0) target = $region17
    $region16: #{_emergent_step.1} parent=1 // pred_region
      _
    $region17: #{_emergent_step.1} parent=1 // pred_fallthru
      _
    // Predicated region
    $region18: #{_emergent_step.1} parent=1 // pred_check
      _
    $region19: #{_emergent_step.1} parent=1 // pred_check_branch
      %39 = sbr.rel (0) target = $region21
    $region20: #{_emergent_step.1} parent=1 // pred_region
      _
    $region21: #{_emergent_step.1} parent=1 // pred_fallthru
      _
    // Predicated region
    $region22: #{_emergent_step.1} parent=1 // pred_check
      _
    $region23: #{_emergent_step.1} parent=1 // pred_check_branch
      %41 = sbr.rel (0) target = $region25
    $region24: #{_emergent_step.1} parent=1 // pred_region
      _
    $region25: #{_emergent_step.1} parent=1 // pred_fallthru
      _
    // Predicated region
    $region26: #{_emergent_step.1} parent=1 // pred_check
      _
    $region27: #{_emergent_step.1} parent=1 // pred_check_branch
      %43 = sbr.rel (0) target = $region29
    $region28: #{_emergent_step.1} parent=1 // pred_region
      %45 = vsyncadd [#allocation7], 0
      %s46 = sshll.u32 %s7, 4
      %s47 = int_to_ptr.hbm [resolvable:$true] %s46
      %s48 = sshll.u32 [#allocation6], 4
      %s49 = int_to_ptr.vmem [resolvable:$true] %s48
      %54 = dma.hbm_to_vmem [thread:$0]  %s47, 512, %s49, [#allocation7], 128, 128, 8
    $region29: #{_emergent_step.1} parent=1 // pred_fallthru
      _
    // Predicated region
    $region30: #{_emergent_step.1} parent=1 // pred_check
      _
    $region31: #{_emergent_step.1} parent=1 // pred_check_branch
      %56 = sbr.rel (0) target = $region33
    $region32: #{_emergent_step.1} parent=1 // pred_region
      %58 = vsyncadd [#allocation10], 0
      %s59 = sshll.u32 %s8, 4
      %s60 = int_to_ptr.hbm [resolvable:$true] %s59
      %s61 = sshll.u32 [#allocation9], 4
      %s62 = int_to_ptr.vmem [resolvable:$true] %s61
      %67 = dma.hbm_to_vmem [thread:$0]  %s60, 512, %s62, [#allocation10], 128, 128, 8
    $region33: #{_emergent_step.1} parent=1 // pred_fallthru
      _
    // Predicated region
    $region34: #{_emergent_step.1} parent=1 // pred_check
      _
    $region35: #{_emergent_step.1} parent=1 // pred_check_branch
      %69 = sbr.rel (0) target = $region37
    $region36: #{_emergent_step.1} parent=1 // pred_region
      _
    $region37: #{_emergent_step.1} parent=1 // pred_fallthru
      _
    // Predicated region
    $region38: #{_emergent_step.1} parent=1 // pred_check
      _
    $region39: #{_emergent_step.1} parent=1 // pred_check_branch
      %71 = sbr.rel (0) target = $region41
    $region40: #{_emergent_step.1} parent=1 // pred_region
      %73 = vsyncadd [#allocation10], 0
      %s74 = sshll.u32 %s10, 4
      %s75 = int_to_ptr.hbm [resolvable:$true] %s74
      %s76 = sshll.u32 [#allocation11], 4
      %s77 = int_to_ptr.vmem [resolvable:$true] %s76
      %82 = dma.hbm_to_vmem [thread:$0]  %s75, 512, %s77, [#allocation10], 128, 128, 8
    $region41: #{_emergent_step.1} parent=1 // pred_fallthru
      _
    // Predicated region
    $region42: #{_emergent_step.1} parent=1 // pred_check
      _
    $region43: #{_emergent_step.1} parent=1 // pred_check_branch
      %84 = sbr.rel (0) target = $region45
    $region44: #{_emergent_step.1} parent=1 // pred_region
      _
    $region45: #{_emergent_step.1} parent=1 // pred_fallthru
      _
    // Predicated region
    $region46: #{_emergent_step.1} parent=1 // pred_check
      _
    $region47: #{_emergent_step.1} parent=1 // pred_check_branch
      %86 = sbr.rel (0) target = $region49
    $region48: #{_emergent_step.1} parent=1 // pred_region
      %88 = vsyncadd [#allocation13], 0
      %s89 = sshll.u32 %s12, 4
      %s90 = int_to_ptr.hbm [resolvable:$true] %s89
      %s91 = sshll.u32 [#allocation12], 4
      %s92 = int_to_ptr.vmem [resolvable:$true] %s91
      %97 = dma.hbm_to_vmem [thread:$0]  %s90, 512, %s92, [#allocation13], 128, 128, 8
    $region49: #{_emergent_step.1} parent=1 // pred_fallthru
      _
    // Predicated region
    $region50: #{_emergent_step.1} parent=1 // pred_check
      _
    $region51: #{_emergent_step.1} parent=1 // pred_check_branch
      %99 = sbr.rel (0) target = $region53
    $region52: #{_emergent_step.1} parent=1 // pred_region
      _
    $region53: #{_emergent_step.1} parent=1 // pred_fallthru
      _
    // Predicated region
    $region54: #{_emergent_step.1} parent=1 // pred_check
      _
    $region55: #{_emergent_step.1} parent=1 // pred_check_branch
      %101 = sbr.rel (0) target = $region57
    $region56: #{_emergent_step.1} parent=1 // pred_region
      %103 = dma.done [#allocation7], 512
    $region57: #{_emergent_step.1} parent=1 // pred_fallthru
      _
    // Predicated region
    $region58: #{_emergent_step.1} parent=1 // pred_check
      _
    $region59: #{_emergent_step.1} parent=1 // pred_check_branch
      %105 = sbr.rel (0) target = $region61
    $region60: #{_emergent_step.1} parent=1 // pred_region
      %107 = dma.done [#allocation10], 512
    $region61: #{_emergent_step.1} parent=1 // pred_fallthru
      _
    // Predicated region
    $region62: #{_emergent_step.1} parent=1 // pred_check
      _
    $region63: #{_emergent_step.1} parent=1 // pred_check_branch
      %109 = sbr.rel (0) target = $region65
    $region64: #{_emergent_step.1} parent=1 // pred_region
      %111 = dma.done [#allocation10], 512
    $region65: #{_emergent_step.1} parent=1 // pred_fallthru
      _
    // Predicated region
    $region66: #{_emergent_step.1} parent=1 // pred_check
      _
    $region67: #{_emergent_step.1} parent=1 // pred_check_branch
      %113 = sbr.rel (0) target = $region69
    $region68: #{_emergent_step.1} parent=1 // pred_region
      %115 = dma.done [#allocation13], 512
    $region69: #{_emergent_step.1} parent=1 // pred_fallthru
      _
    %s116 = sld [smem:[#allocation4]]
    %s117 = sld [smem:[#allocation5]]
    %s118 = scalar_lea.hbm %s6, %s117
    // Predicated region
    $region70: #{_emergent_step.1} parent=1 // pred_check
      _
    $region71: #{_emergent_step.1} parent=1 // pred_check_branch
      %120 = sbr.rel target = $region73
    $region72: #{_emergent_step.1} parent=1 // pred_region
      %121 = sst [smem:[#allocation19]] [#allocation18]
      %122 = sst [smem:[#allocation20]] [#allocation17]
    $region73: #{_emergent_step.1} parent=1 // pred_fallthru
      _
    %124 = shalt.err (0)
    %s126 = sshll.u32 %s118, 4
    %s127 = int_to_ptr.hbm [resolvable:$true] %s126
    %s128 = sshll.u32 [#allocation2], 4
    %s129 = int_to_ptr.vmem [resolvable:$true] %s128
    %131 = dma.hbm_to_vmem [thread:$0]  %s127, 16, %s129, [#allocation3]
    %v132 = vld [vmem:[%s2] sm:$0x3]
    %v133 = vld [vmem:[#allocation6] sm:$0xff]
    %v134 = vld [vmem:[#allocation6 + $0x8] sm:$0xff]
    %v135 = vld [vmem:[#allocation6 + $0x10] sm:$0xff]
    %v136 = vld [vmem:[#allocation6 + $0x18] sm:$0xff]
    %v137 = vld [vmem:[%s3] sm:$0x3]
    %v138 = vld [vmem:[#allocation9] sm:$0xff]
    %v139 = vld [vmem:[#allocation9 + $0x8] sm:$0xff]
    %v140 = vld [vmem:[#allocation9 + $0x10] sm:$0xff]
    %v141 = vld [vmem:[#allocation9 + $0x18] sm:$0xff]
    %vm142 = vcmask 261120
    %v144 = vsel %vm142, %v137, 0
    %146 = vmatpush.msra.mxu0 0.0
    %147 = vmatpush.msra.mxu0 0.0
    %148 = vmatpush.msra.mxu0 0.0
    %149 = vmatpush.msra.mxu0 0.0
    %150 = vmatpush.msra.mxu0 0.0
    %151 = vmatpush.msra.mxu0 0.0
    %152 = vmatpush.msra.mxu0 0.0
    %153 = vmatpush.msra.mxu0 0.0
    %154 = vmatpush.msra.mxu0 0.0
    %155 = vmatpush.msra.mxu0 0.0
    %156 = vmatpush.msra.mxu0 0.0
    %157 = vmatpush.msra.mxu0 0.0
    %158 = vmatpush.msra.mxu0 %v141
    %159 = vmatpush.msra.mxu0 %v140
    %160 = vmatpush.msra.mxu0 %v139
    %161 = vmatpush.msra.mxu0 %v138
    %162 = vmatmul.f32.gmra.mxu0 %v144
    %v163 = vpop.f32.mrf.mxu0
    %v164 = vadd.f32 0.0, %v163
    %165 = vdwg.mxu0
    %v167 = vsel %vm142, %v132, 0
    %169 = vmatpush.msra.mxu0 0.0
    %170 = vmatpush.msra.mxu0 0.0
    %171 = vmatpush.msra.mxu0 0.0
    %172 = vmatpush.msra.mxu0 0.0
    %173 = vmatpush.msra.mxu0 0.0
    %174 = vmatpush.msra.mxu0 0.0
    %175 = vmatpush.msra.mxu0 0.0
    %176 = vmatpush.msra.mxu0 0.0
    %177 = vmatpush.msra.mxu0 0.0
    %178 = vmatpush.msra.mxu0 0.0
    %179 = vmatpush.msra.mxu0 0.0
    %180 = vmatpush.msra.mxu0 0.0
    %181 = vmatpush.msra.mxu0 %v136
    %182 = vmatpush.msra.mxu0 %v135
    %183 = vmatpush.msra.mxu0 %v134
    %184 = vmatpush.msra.mxu0 %v133
    %185 = vmatmul.f32.gmra.mxu0 %v167
    %v186 = vpop.f32.mrf.mxu0
    %v187 = vadd.f32 %v164, %v186
    %188 = vdwg.mxu0
    %v189 = vld [vmem:[%s9] sm:$0x1]
    %v191 = vperm.slane %v189, 0
    %v193 = vadd.f32 %v187, %v191
    %v194 = vmul.f32 %v193, 0.5
    %v195 = vmul.f32 %v193, 0.70710677
    %v196 = vmul.f32 %v195, %v195
    %v197 = vmin.f32 16.0, %v196
    %v198 = vmul.f32 %v197, 2.1237322e-06
    %v199 = vadd.f32 %v198, 0.00028619796
    %v200 = vmul.f32 %v197, %v199
    %v201 = vadd.f32 %v200, 0.0036580483
    %v202 = vmul.f32 %v197, %v201
    %v203 = vadd.f32 %v202, 0.05243302
    %v204 = vmul.f32 %v197, %v203
    %v205 = vadd.f32 %v204, 0.18741608
    %v206 = vmul.f32 %v197, %v205
    %v207 = vadd.f32 %v206, 1.1283791
    %v208 = vmul.f32 %v195, %v207
    %v209 = vmul.f32 %v197, 3.8918573e-05
    %v210 = vadd.f32 %v209, 0.001143296
    %v211 = vmul.f32 %v197, %v210
    %v212 = vadd.f32 %v211, 0.014752088
    %v213 = vmul.f32 %v197, %v212
    %v214 = vadd.f32 %v213, 0.112945676
    %v215 = vmul.f32 %v197, %v214
    %v216 = vadd.f32 %v215, 0.4994258
    %v217 = vmul.f32 %v197, %v216
    %v218 = vadd.f32 %v217, 1.0
    %v219 = vrcp.pop %v218
    %v220 = vmul.f32 %v218, %v219
    %v221 = vsub.f32 1.0, %v220
    %v222 = vmul.f32 %v219, %v221
    %v223 = vadd.f32 %v219, %v222
    %vm224 = vweird.f32 %v218
    %vm225 = vweird.f32 %v219
    %vm226 = vmor %vm224, %vm225
    %v227 = vsel %vm226, %v219, %v223
    %v228 = vand.u32 2147483647, %v218
    %vm229 = vcmp.eq.f32.partialorder %v228, 8.507059e+37
    %v230 = vand.u32 %v218, 2147483648
    %v231 = vor.u32 1.1754944e-38, %v230
    %v232 = vsel %vm229, %v231, %v227
    %v233 = vmul.f32 %v208, %v232
    %v234 = vmin.f32 %v233, 1.0
    %v235 = vmax.f32 %v234, -1.0
    %v236 = vadd.f32 %v235, 1.0
    %v237 = vmul.f32 %v194, %v236
    %v238 = vld [vmem:[#allocation11] sm:$0xff]
    %v239 = vld [vmem:[#allocation11 + $0x8] sm:$0xff]
    %v240 = vld [vmem:[#allocation11 + $0x10] sm:$0xff]
    %v241 = vld [vmem:[#allocation11 + $0x18] sm:$0xff]
    %v242 = vld [vmem:[%s11] sm:$0x1]
    %v244 = vperm.slane %v242, 0
    %v247 = vsel %vm142, %v237, 0
    %249 = vmatpush.msra.mxu0 0.0
    %250 = vmatpush.msra.mxu0 0.0
    %251 = vmatpush.msra.mxu0 0.0
    %252 = vmatpush.msra.mxu0 0.0
    %253 = vmatpush.msra.mxu0 0.0
    %254 = vmatpush.msra.mxu0 0.0
    %255 = vmatpush.msra.mxu0 0.0
    %256 = vmatpush.msra.mxu0 0.0
    %257 = vmatpush.msra.mxu0 0.0
    %258 = vmatpush.msra.mxu0 0.0
    %259 = vmatpush.msra.mxu0 0.0
    %260 = vmatpush.msra.mxu0 0.0
    %261 = vmatpush.msra.mxu0 %v241
    %262 = vmatpush.msra.mxu0 %v240
    %263 = vmatpush.msra.mxu0 %v239
    %264 = vmatpush.msra.mxu0 %v238
    %265 = vmatmul.f32.gmra.mxu0 %v247
    %v266 = vpop.f32.mrf.mxu0
    %v267 = vadd.f32 %v244, %v266
    %268 = vdwg.mxu0
    %v269 = vmul.f32 %v267, 0.5
    %v270 = vmul.f32 %v267, 0.70710677
    %v271 = vmul.f32 %v270, %v270
    %v272 = vmin.f32 16.0, %v271
    %v273 = vmul.f32 %v272, 2.1237322e-06
    %v274 = vadd.f32 %v273, 0.00028619796
    %v275 = vmul.f32 %v272, %v274
    %v276 = vadd.f32 %v275, 0.0036580483
    %v277 = vmul.f32 %v272, %v276
    %v278 = vadd.f32 %v277, 0.05243302
    %v279 = vmul.f32 %v272, %v278
    %v280 = vadd.f32 %v279, 0.18741608
    %v281 = vmul.f32 %v272, %v280
    %v282 = vadd.f32 %v281, 1.1283791
    %v283 = vmul.f32 %v270, %v282
    %v284 = vmul.f32 %v272, 3.8918573e-05
    %v285 = vadd.f32 %v284, 0.001143296
    %v286 = vmul.f32 %v272, %v285
    %v287 = vadd.f32 %v286, 0.014752088
    %v288 = vmul.f32 %v272, %v287
    %v289 = vadd.f32 %v288, 0.112945676
    %v290 = vmul.f32 %v272, %v289
    %v291 = vadd.f32 %v290, 0.4994258
    %v292 = vmul.f32 %v272, %v291
    %v293 = vadd.f32 %v292, 1.0
    %v294 = vrcp.pop %v293
    %v295 = vmul.f32 %v293, %v294
    %v296 = vsub.f32 1.0, %v295
    %v297 = vmul.f32 %v294, %v296
    %v298 = vadd.f32 %v294, %v297
    %vm299 = vweird.f32 %v293
    %vm300 = vweird.f32 %v294
    %vm301 = vmor %vm299, %vm300
    %v302 = vsel %vm301, %v294, %v298
    %v303 = vand.u32 2147483647, %v293
    %vm304 = vcmp.eq.f32.partialorder %v303, 8.507059e+37
    %v305 = vand.u32 %v293, 2147483648
    %v306 = vor.u32 1.1754944e-38, %v305
    %v307 = vsel %vm304, %v306, %v302
    %v308 = vmul.f32 %v283, %v307
    %v309 = vmin.f32 %v308, 1.0
    %v310 = vmax.f32 %v309, -1.0
    %v311 = vadd.f32 %v310, 1.0
    %v312 = vmul.f32 %v269, %v311
    %v313 = vld [vmem:[#allocation12] sm:$0xff]
    %v314 = vld [vmem:[#allocation12 + $0x8] sm:$0xff]
    %v315 = vld [vmem:[#allocation12 + $0x10] sm:$0xff]
    %v316 = vld [vmem:[#allocation12 + $0x18] sm:$0xff]
    %v317 = vld [vmem:[%s13] sm:$0x1]
    %v319 = vperm.slane %v317, 0
    %v322 = vsel %vm142, %v312, 0
    %324 = vmatpush.msra.mxu0 0.0
    %325 = vmatpush.msra.mxu0 0.0
    %326 = vmatpush.msra.mxu0 0.0
    %327 = vmatpush.msra.mxu0 0.0
    %328 = vmatpush.msra.mxu0 0.0
    %329 = vmatpush.msra.mxu0 0.0
    %330 = vmatpush.msra.mxu0 0.0
    %331 = vmatpush.msra.mxu0 0.0
    %332 = vmatpush.msra.mxu0 0.0
    %333 = vmatpush.msra.mxu0 0.0
    %334 = vmatpush.msra.mxu0 0.0
    %335 = vmatpush.msra.mxu0 0.0
    %336 = vmatpush.msra.mxu0 %v316
    %337 = vmatpush.msra.mxu0 %v315
    %338 = vmatpush.msra.mxu0 %v314
    %339 = vmatpush.msra.mxu0 %v313
    %340 = vmatmul.f32.gmra.mxu0 %v322
    %v341 = vpop.f32.mrf.mxu0
    %v342 = vadd.f32 %v319, %v341
    %343 = vdwg.mxu0
    %vm344 = vcmask 254976
    %345 = vst.msk [vmem:[#allocation14] sm:$0x3] %vm344, %v342
    %v346 = vld [vmem:[%s4] sm:$0x1]
    %v347 = vld [vmem:[%s5] sm:$0x1]
    %v348 = vmul.f32 %v347, %v346
    %vm349 = vcmask 1040384
    %v350 = vsel %vm349, %v348, 0.0
    %351 = vadd.xlane.f32.xlu0 %v350
    %v352 = vpop.xlane.xlu0 %351
    %v353 = vrot.slane %v352, 4
    %v354 = vadd.f32 %v352, %v353
    %v355 = vrot.slane %v354, 2
    %v356 = vadd.f32 %v354, %v355
    %v357 = vrot.slane %v356, 1
    %v358 = vadd.f32 %v356, %v357
    %s359 = vtos %v358
    %p360 = scmp.gt.s32.totalorder %s116, 1
    %s361 = scalar_select %p360, %s116, 1
    %s362 = scvt.s32.f32 %s361
    %v363 = vstv %s362
    %v364 = vrcp.pop %v363
    %v365 = vmul.f32 %v363, %v364
    %v366 = vsub.f32 1.0, %v365
    %v367 = vmul.f32 %v364, %v366
    %v368 = vadd.f32 %v364, %v367
    %vm369 = vweird.f32 %v363
    %vm370 = vweird.f32 %v364
    %vm371 = vmor %vm369, %vm370
    %v372 = vsel %vm371, %v364, %v368
    %v373 = vand.u32 2147483647, %v363
    %vm374 = vcmp.eq.f32.partialorder %v373, 8.507059e+37
    %v375 = vand.u32 %v363, 2147483648
    %v376 = vor.u32 1.1754944e-38, %v375
    %v377 = vsel %vm374, %v376, %v372
    %s378 = vtos %v377
    %s379 = smul.f32 %s359, %s378
    %p380 = scmp.gt.s32.totalorder %s116, 0
    %s381 = ssub.f32 1.0, %s379
    %s382 = scalar_select %p380, %s381, 1.0
    %v383 = vsel %vm344, %v132, -inf
    %384 = vmax.xlane.f32.xlu0 %v383
    %v385 = vpop.xlane.xlu0 %384
    %v386 = vsub.f32 %v132, %v385
    %v387 = vmul.f32 %v386, 1.442695
    %v388 = vpow.pop %v387
    %v389 = vsel %vm344, %v388, 0.0
    %390 = vadd.xlane.f32.xlu0 %v389
    %v391 = vpop.xlane.xlu0 %390
    %v392 = vrcp.pop %v391
    %v393 = vmul.f32 %v391, %v392
    %v394 = vsub.f32 1.0, %v393
    %v395 = vmul.f32 %v392, %v394
    %v396 = vadd.f32 %v392, %v395
    %vm397 = vweird.f32 %v391
    %vm398 = vweird.f32 %v392
    %vm399 = vmor %vm397, %vm398
    %v400 = vsel %vm399, %v392, %v396
    %v401 = vand.u32 2147483647, %v391
    %vm402 = vcmp.eq.f32.partialorder %v401, 8.507059e+37
    %v403 = vand.u32 %v391, 2147483648
    %v404 = vor.u32 1.1754944e-38, %v403
    %v405 = vsel %vm402, %v404, %v400
    %v406 = vmul.f32 %v388, %v405
    %v407 = vlog2.pop %v391
    %v408 = vmul.f32 %v407, 0.6931472
    %v409 = vsub.f32 %v386, %v408
    %v410 = vmul.f32 %v406, %v409
    %v411 = vsel %vm344, %v410, 0.0
    %412 = vadd.xlane.f32.xlu0 %v411
    %v413 = vpop.xlane.xlu0 %412
    %v414 = vrot.slane %v413, 4
    %v415 = vadd.f32 %v413, %v414
    %v416 = vrot.slane %v415, 2
    %v417 = vadd.f32 %v415, %v416
    %v418 = vrot.slane %v417, 1
    %v419 = vadd.f32 %v417, %v418
    %s420 = vtos %v419
    %s421 = ssub.f32 0.0, %s420
    %v422 = vlaneseq
    %v423 = vshrl.u32 %v422, 7
    %v424 = vlaneseq
    %v425 = vand.u32 %v424, 127
    %vm426 = vcmp.gt.s32.totalorder %v423, 0
    %vm427 = vcmp.lt.s32.totalorder %v423, 1
    %vm428 = vmand %vm426, %vm427
    %v429 = vadd.s32 %v423, 1
    %vm430 = vcmp.eq.s32.totalorder %v425, %v429
    %vm431 = vmand %vm428, %vm430
    %v432 = vsel %vm431, 0.5, 0.0
    %v433 = vsub.s32 %v423, 1
    %vm434 = vcmp.eq.s32.totalorder %v425, %v433
    %vm435 = vmand %vm428, %vm434
    %v436 = vsel %vm435, -0.5, 0.0
    %v437 = vadd.f32 %v432, %v436
    %vm438 = vcmp.eq.s32.totalorder %v423, 0
    %vm439 = vcmp.eq.s32.totalorder %v425, 1
    %vm440 = vmand %vm438, %vm439
    %v441 = vsel %vm440, 1.0, 0.0
    %v442 = vadd.f32 %v437, %v441
    %vm443 = vcmp.eq.s32.totalorder %v425, 0
    %vm444 = vmand %vm438, %vm443
    %v445 = vsel %vm444, -1.0, 0.0
    %v446 = vadd.f32 %v442, %v445
    %vm447 = vcmp.eq.s32.totalorder %v423, 1
    %vm448 = vmand %vm447, %vm439
    %v449 = vsel %vm448, 1.0, 0.0
    %v450 = vadd.f32 %v446, %v449
    %vm451 = vmand %vm447, %vm443
    %v452 = vsel %vm451, -1.0, 0.0
    %v453 = vadd.f32 %v450, %v452
    %vm454 = vcmask 15360
    %v456 = vsel %vm454, %v453, 0
    %vm458 = vcmask 1041408
    %v459 = vsel %vm458, %v132, 0
    %461 = vmatpush.msra.mxu0 0.0
    %462 = vmatpush.msra.mxu0 0.0
    %463 = vmatpush.msra.mxu0 0.0
    %464 = vmatpush.msra.mxu0 0.0
    %465 = vmatpush.msra.mxu0 0.0
    %466 = vmatpush.msra.mxu0 0.0
    %467 = vmatpush.msra.mxu0 0.0
    %468 = vmatpush.msra.mxu0 0.0
    %469 = vmatpush.msra.mxu0 0.0
    %470 = vmatpush.msra.mxu0 0.0
    %471 = vmatpush.msra.mxu0 0.0
    %472 = vmatpush.msra.mxu0 0.0
    %473 = vmatpush.msra.mxu0 0.0
    %474 = vmatpush.msra.mxu0 0.0
    %475 = vmatpush.msra.mxu0 0.0
    %476 = vmatpush.msra.mxu0 %v459
    %477 = vmatmul.f32.gmra.mxu0 %v456
    %v478 = vpop.f32.mrf.mxu0
    %v479 = vadd.f32 0.0, %v478
    %480 = vdwg.mxu0
    %v481 = vmul.f32 %v479, %v479
    %v482 = vsel %vm344, %v481, 0.0
    %483 = vadd.xlane.f32.xlu0 %v482
    %v484 = vpop.xlane.xlu0 %483
    %v485 = vrot.slane %v484, 4
    %v486 = vadd.f32 %v484, %v485
    %v487 = vrot.slane %v486, 2
    %v488 = vadd.f32 %v486, %v487
    %v489 = vrot.slane %v488, 1
    %v490 = vadd.f32 %v488, %v489
    %s491 = vtos %v490
    %v492 = vstv %s491
    %v493 = vrsqrt.pop %v492
    %v494 = vmul.f32 %v493, %v492
    %v495 = vmul.f32 %v494, %v493
    %v496 = vmul.f32 0.5, %v495
    %v497 = vsub.f32 1.5, %v496
    %v498 = vmul.f32 %v493, %v497
    %v499 = vmul.f32 %v492, %v498
    %vm500 = vcmp.eq.f32.partialorder %v492, inf
    %v501 = vsel %vm500, %v492, %v499
    %vm502 = vcmp.eq.f32.partialorder %v492, 0.0
    %v503 = vand.u32 %v492, 2147483648
    %v504 = vsel %vm502, %v503, %v501
    %s505 = vtos %v504
    %s506 = smul.f32 %s421, %s505
    %s507 = smin.f32 %s506, 5.0
    %v508 = vstv %s382
    %v509 = vsel %vm443, %v508, 0.0
    %v510 = vstv %s507
    %v511 = vsel %vm439, %v510, %v509
    %512 = vst [vmem:[%s15] sm:$0x1] %v511
    %s513 = smul.u32 1, 1
    %s514 = sshll.u32 %s513, 4
    %515 = dma.done [#allocation3], %s514
    %v516 = vld [vmem:[%s5] sm:$0x1]
    %v517 = vld [vmem:[#allocation2] sm:$0x1]
    %v518 = vsub.f32 %v516, %v517
    %v519 = vadd.f32 %v518, %v346
    %520 = vst [vmem:[#allocation15] sm:$0x1] %v519
    %s521 = scalar_lea.hbm %s17, %s117
    // Predicated region
    $region74: #{_emergent_step.1} parent=1 // pred_check
      _
    $region75: #{_emergent_step.1} parent=1 // pred_check_branch
      %523 = sbr.rel target = $region77
    $region76: #{_emergent_step.1} parent=1 // pred_region
      %524 = sst [smem:[#allocation19]] [#allocation22]
      %525 = sst [smem:[#allocation20]] [#allocation21]
    $region77: #{_emergent_step.1} parent=1 // pred_fallthru
      _
    %527 = shalt.err (0)
    %s529 = sshll.u32 %s4, 4
    %s530 = int_to_ptr.vmem [resolvable:$true] %s529
    %s531 = sshll.u32 %s521, 4
    %s532 = int_to_ptr.hbm [resolvable:$true] %s531
    %534 = dma.vmem_to_hbm [thread:$0]  %s530, 16, %s532, [#allocation3]
    %s535 = sshll.u32 %s513, 4
    %536 = dma.done [#allocation3], %s535
    // Predicated region
    $region78: #{_emergent_step.1} parent=1 // pred_check
      _
    $region79: #{_emergent_step.1} parent=1 // pred_check_branch
      %538 = sbr.rel (0) target = $region81
    $region80: #{_emergent_step.1} parent=1 // pred_region
      %540 = vsyncadd [#allocation8], 0
      %s542 = sshll.u32 [#allocation14], 4
      %s543 = int_to_ptr.vmem [resolvable:$true] %s542
      %s544 = sshll.u32 %s14, 4
      %s545 = int_to_ptr.hbm [resolvable:$true] %s544
      %547 = dma.vmem_to_hbm [thread:$0]  %s543, 32, %s545, [#allocation8]
    $region81: #{_emergent_step.1} parent=1 // pred_fallthru
      _
    // Predicated region
    $region82: #{_emergent_step.1} parent=1 // pred_check
      _
    $region83: #{_emergent_step.1} parent=1 // pred_check_branch
      %549 = sbr.rel (0) target = $region85
    $region84: #{_emergent_step.1} parent=1 // pred_region
      _
    $region85: #{_emergent_step.1} parent=1 // pred_fallthru
      _
    // Predicated region
    $region86: #{_emergent_step.1} parent=1 // pred_check
      _
    $region87: #{_emergent_step.1} parent=1 // pred_check_branch
      %551 = sbr.rel (0) target = $region89
    $region88: #{_emergent_step.1} parent=1 // pred_region
      %553 = vsyncadd [#allocation16], 0
      %s555 = sshll.u32 [#allocation15], 4
      %s556 = int_to_ptr.vmem [resolvable:$true] %s555
      %s557 = sshll.u32 %s16, 4
      %s558 = int_to_ptr.hbm [resolvable:$true] %s557
      %560 = dma.vmem_to_hbm [thread:$0]  %s556, 16, %s558, [#allocation16]
    $region89: #{_emergent_step.1} parent=1 // pred_fallthru
      _
    // Predicated region
    $region90: #{_emergent_step.1} parent=1 // pred_check
      _
    $region91: #{_emergent_step.1} parent=1 // pred_check_branch
      %562 = sbr.rel (0) target = $region93
    $region92: #{_emergent_step.1} parent=1 // pred_region
      %564 = dma.done [#allocation8], 32
    $region93: #{_emergent_step.1} parent=1 // pred_fallthru
      _
    // Predicated region
    $region94: #{_emergent_step.1} parent=1 // pred_check
      _
    $region95: #{_emergent_step.1} parent=1 // pred_check_branch
      %566 = sbr.rel (0) target = $region97
    $region96: #{_emergent_step.1} parent=1 // pred_region
      _
    $region97: #{_emergent_step.1} parent=1 // pred_fallthru
      _
    // Predicated region
    $region98: #{_emergent_step.1} parent=1 // pred_check
      _
    $region99: #{_emergent_step.1} parent=1 // pred_check_branch
      %568 = sbr.rel (0) target = $region101
    $region100: #{_emergent_step.1} parent=1 // pred_region
      %570 = dma.done [#allocation16], 16
    $region101: #{_emergent_step.1} parent=1 // pred_fallthru
      _
    %571 = vsyncpa [#allocation7], 1
    %572 = vsyncpa [#allocation10], 1
    %573 = vsyncpa [#allocation13], 1
    %574 = vsyncpa [#allocation8], 1
    %575 = vsyncpa [#allocation16], 1
  %576 = vsyncmov [#allocation3]
  %s577 = vpop.sfrf %576
  %p578 = scmp.eq.s32.totalorder %s577, 0
  %p579 = pneg %p578
  %581 = shalt.err (%p579)

</llo_original>
